<compile_context>
chip_gen: v6e
topology: v6e:2x2x1
jax: 0.10.0
libtpu: 0.0.40
codegen_flags: <defaults>
</compile_context>

<pallas_src>
import jax
import jax.numpy as jnp
from jax.experimental import pallas as pl
from jax.experimental.pallas import tpu as pltpu

EPS = 1e-5
LANE = 128


def _build_kernel(nc):
    def classifier_kernel(
        x_ref,
        w1_ref, b1_ref,
        w2_ref, b2_ref,
        w3_ref, b3_ref,
        w4_ref, b4_ref,
        out_ref,
    ):
        # BN already folded into (w1,b1)/(w2,b2); Dropout = identity in eval.
        x = x_ref[...].astype(w1_ref.dtype)  # in-kernel f32 -> bf16 cast (VPU)

        h = jnp.dot(x, w1_ref[...], preferred_element_type=jnp.float32) + b1_ref[...]
        h = jnp.maximum(h, 0.0)

        h = jnp.dot(h.astype(w2_ref.dtype), w2_ref[...],
                    preferred_element_type=jnp.float32) + b2_ref[...]
        h = jnp.maximum(h, 0.0)

        h = jnp.dot(h.astype(w3_ref.dtype), w3_ref[...],
                    preferred_element_type=jnp.float32) + b3_ref[...]
        h = jnp.maximum(h, 0.0)

        out = jnp.dot(h.astype(w4_ref.dtype), w4_ref[...],
                      preferred_element_type=jnp.float32) + b4_ref[...]
        # Store only the real class lanes (block last dim == full array dim).
        out_ref[...] = out[:, :nc].astype(out_ref.dtype)

    return classifier_kernel


def fold_params(p, *, matmul_dtype=jnp.bfloat16):
    """Fold BatchNorm1d (running stats) into fc1/fc2; lane-pad fc3/fc4."""
    s1 = p["g1"] * jax.lax.rsqrt(p["rv1"] + EPS)          # (1, 512)
    s2 = p["g2"] * jax.lax.rsqrt(p["rv2"] + EPS)          # (1, 128)
    w1 = p["w1"] * s1
    b1 = (p["b1"] - p["rm1"]) * s1 + p["be1"]
    w2 = p["w2"] * s2
    b2 = (p["b2"] - p["rm2"]) * s2 + p["be2"]

    # fc3: pad output dim (32 -> 128) with zero columns so the intermediate
    # after ReLU is lane-dense.  Exact: ReLU(0)=0.
    d3_in, d3_out = p["w3"].shape
    d3_pad = max(LANE, ((d3_out + LANE - 1) // LANE) * LANE)
    w3 = jnp.zeros((d3_in, d3_pad), jnp.float32).at[:, :d3_out].set(p["w3"])
    b3 = jnp.zeros((1, d3_pad), jnp.float32).at[:, :d3_out].set(p["b3"])

    # fc4: pad input rows (32 -> 128, matching fc3 padding; zero rows
    # contribute nothing) and output dim up to a multiple of 128 lanes.
    d4_in, nc = p["w4"].shape
    nc_pad = max(LANE, ((nc + LANE - 1) // LANE) * LANE)
    w4 = jnp.zeros((d3_pad, nc_pad), jnp.float32).at[:d4_in, :nc].set(p["w4"])
    b4 = jnp.zeros((1, nc_pad), jnp.float32).at[:, :nc].set(p["b4"])

    return {
        "w1": w1.astype(matmul_dtype), "b1": b1.astype(jnp.float32),
        "w2": w2.astype(matmul_dtype), "b2": b2.astype(jnp.float32),
        "w3": w3.astype(matmul_dtype), "b3": b3.astype(jnp.float32),
        "w4": w4.astype(matmul_dtype), "b4": b4.astype(jnp.float32),
        "num_classes": nc,
    }


def _device_kind():
    try:
        return jax.devices()[0].device_kind.lower()
    except Exception:
        return ""


def _pick_batch_tile(B, batch_tile):
    # Cap at 1024 rows: ~6 MiB of live VMEM at that tile, safely inside even
    # v5e's 16 MiB scoped-VMEM default while amortizing per-step overhead.
    cap = 1024
    if batch_tile is None:
        if "v7" in _device_kind() and B >= 32:
            # v7x has 2 TensorCores: force >=2 grid steps so the "parallel"
            # batch axis can be sharded across both cores.
            half = ((pl.cdiv(B, 2) + 7) // 8) * 8
            batch_tile = min(cap, half)
        else:
            batch_tile = B if B <= cap else cap
    batch_tile = min(batch_tile, B)
    if batch_tile != B and batch_tile % 8 != 0:
        batch_tile = max(8, (batch_tile // 8) * 8)
    return batch_tile


def classifier_forward(x, folded, *, batch_tile=None):
    B, input_size = x.shape
    nc = folded["num_classes"]
    nc_pad = folded["w4"].shape[1]
    matmul_dtype = folded["w1"].dtype

    batch_tile = _pick_batch_tile(B, batch_tile)
    grid = (pl.cdiv(B, batch_tile),)

    def full2d(arr):
        return pl.BlockSpec(arr.shape, lambda i: (0, 0))

    in_specs = [
        pl.BlockSpec((batch_tile, input_size), lambda i: (i, 0)),
        full2d(folded["w1"]), full2d(folded["b1"]),
        full2d(folded["w2"]), full2d(folded["b2"]),
        full2d(folded["w3"]), full2d(folded["b3"]),
        full2d(folded["w4"]), full2d(folded["b4"]),
    ]

    h1 = folded["w1"].shape[1]
    h2 = folded["w2"].shape[1]
    h3 = folded["w3"].shape[1]
    flops = 2 * B * (input_size * h1 + h1 * h2 + h2 * h3 + h3 * nc_pad)
    w_bytes = sum(int(folded[k].size) * folded[k].dtype.itemsize
                  for k in ("w1", "w2", "w3", "w4"))
    b_bytes = sum(int(folded[k].size) * 4 for k in ("b1", "b2", "b3", "b4"))
    io_bytes = (w_bytes + b_bytes
                + B * input_size * x.dtype.itemsize   # f32 x read directly
                + B * nc * 4)                         # unpadded logits write

    out = pl.pallas_call(
        _build_kernel(nc),
        out_shape=jax.ShapeDtypeStruct((B, nc), jnp.float32),
        grid_spec=pltpu.PrefetchScalarGridSpec(
            num_scalar_prefetch=0,
            grid=grid,
            in_specs=in_specs,
            out_specs=pl.BlockSpec((batch_tile, nc), lambda i: (i, 0)),
        ),
        compiler_params=pltpu.CompilerParams(
            dimension_semantics=("parallel",),
        ),
        cost_estimate=pl.CostEstimate(
            flops=flops, transcendentals=0, bytes_accessed=io_bytes),
    )(
        x,  # f32; cast to bf16 happens inside the kernel
        folded["w1"], folded["b1"],
        folded["w2"], folded["b2"],
        folded["w3"], folded["b3"],
        folded["w4"], folded["b4"],
    )
    return out


def init_params(key, input_size, num_classes):
    dims = [(input_size, 512), (512, 128), (128, 32), (32, num_classes)]
    keys = jax.random.split(key, 16)
    p = {}
    # Linear layers (weights stored transposed as (in, out))
    for idx, (din, dout) in enumerate(dims, start=1):
        kw, kb = keys[2 * (idx - 1)], keys[2 * (idx - 1) + 1]
        bound = 1.0 / jnp.sqrt(din)
        p[f"w{idx}"] = jax.random.uniform(kw, (din, dout), jnp.float32, -bound, bound)
        p[f"b{idx}"] = jax.random.uniform(kb, (1, dout), jnp.float32, -bound, bound)
    # BatchNorm1d (inference: gamma, beta, running_mean, running_var)
    for bidx, d in [(1, 512), (2, 128)]:
        k0 = keys[8 + 3 * (bidx - 1)]
        k1 = keys[9 + 3 * (bidx - 1)]
        k2 = keys[10 + 3 * (bidx - 1)]
        p[f"g{bidx}"] = 1.0 + 0.1 * jax.random.normal(k0, (1, d), jnp.float32)
        p[f"be{bidx}"] = 0.1 * jax.random.normal(k1, (1, d), jnp.float32)
        p[f"rm{bidx}"] = 0.1 * jax.random.normal(k2, (1, d), jnp.float32)
        p[f"rv{bidx}"] = jnp.ones((1, d), jnp.float32)
    return p


def reference_forward(x, p):
    h = x @ p["w1"] + p["b1"]
    h = (h - p["rm1"]) / jnp.sqrt(p["rv1"] + EPS) * p["g1"] + p["be1"]
    h = jnp.maximum(h, 0.0)
    h = h @ p["w2"] + p["b2"]
    h = (h - p["rm2"]) / jnp.sqrt(p["rv2"] + EPS) * p["g2"] + p["be2"]
    h = jnp.maximum(h, 0.0)
    h = jnp.maximum(h @ p["w3"] + p["b3"], 0.0)
    return h @ p["w4"] + p["b4"]


if __name__ == "__main__":
    key = jax.random.PRNGKey(0)
    k_x, k_p = jax.random.split(key)

    batch, input_size, num_classes = 16, 32, 10
    x = jax.random.normal(k_x, (batch, input_size), jnp.float32)
    params = init_params(k_p, input_size, num_classes)

    folded = fold_params(params, matmul_dtype=jnp.bfloat16)
    out = classifier_forward(x, folded)
    out = jax.block_until_ready(out)

    ref = reference_forward(x, params)
    assert out.shape == (batch, num_classes), out.shape
    # bf16 MXU inputs with f32 accumulation vs full-f32 reference.
    assert jnp.allclose(out, ref, atol=5e-2, rtol=5e-2), (
        "mismatch vs JAX reference; max abs err = "
        f"{float(jnp.max(jnp.abs(out - ref)))}"
    )

    print("KERNEL_OK")
</pallas_src>

<mosaic_0001>
module attributes {stable_mosaic.version = 11 : i64} {
  func.func @classifier_kernel(%arg0: i32, %arg1: memref<16x32xf32, #tpu.memory_space<vmem>>, %arg2: memref<32x512xbf16, #tpu.memory_space<vmem>>, %arg3: memref<1x512xf32, #tpu.memory_space<vmem>>, %arg4: memref<512x128xbf16, #tpu.memory_space<vmem>>, %arg5: memref<1x128xf32, #tpu.memory_space<vmem>>, %arg6: memref<128x128xbf16, #tpu.memory_space<vmem>>, %arg7: memref<1x128xf32, #tpu.memory_space<vmem>>, %arg8: memref<128x128xbf16, #tpu.memory_space<vmem>>, %arg9: memref<1x128xf32, #tpu.memory_space<vmem>>, %arg10: memref<16x10xf32, #tpu.memory_space<vmem>>) attributes {dimension_semantics = [#tpu.dimension_semantics<parallel>], iteration_bounds = array<i64: 1>, scalar_prefetch = 0 : i64, scratch_operands = 0 : i64, tpu.core_type = #tpu.core_type<tc>, window_params = [{transform_indices = @transform_0, window_bounds = array<i64: 16, 32>}, {pipeline_mode = #tpu.pipeline_mode<synchronous>, transform_indices = @transform_1, window_bounds = array<i64: 32, 512>}, {pipeline_mode = #tpu.pipeline_mode<synchronous>, transform_indices = @transform_2, window_bounds = array<i64: 1, 512>}, {pipeline_mode = #tpu.pipeline_mode<synchronous>, transform_indices = @transform_3, window_bounds = array<i64: 512, 128>}, {pipeline_mode = #tpu.pipeline_mode<synchronous>, transform_indices = @transform_4, window_bounds = array<i64: 1, 128>}, {pipeline_mode = #tpu.pipeline_mode<synchronous>, transform_indices = @transform_5, window_bounds = array<i64: 128, 128>}, {pipeline_mode = #tpu.pipeline_mode<synchronous>, transform_indices = @transform_6, window_bounds = array<i64: 1, 128>}, {pipeline_mode = #tpu.pipeline_mode<synchronous>, transform_indices = @transform_7, window_bounds = array<i64: 128, 128>}, {pipeline_mode = #tpu.pipeline_mode<synchronous>, transform_indices = @transform_8, window_bounds = array<i64: 1, 128>}, {transform_indices = @transform_9, window_bounds = array<i64: 16, 10>}]} {
    %c0 = arith.constant 0 : index
    %c0_0 = arith.constant 0 : index
    %0 = vector.load %arg1[%c0, %c0_0] : memref<16x32xf32, #tpu.memory_space<vmem>>, vector<16x32xf32>
    %1 = arith.truncf %0 : vector<16x32xf32> to vector<16x32xbf16>
    %c0_1 = arith.constant 0 : index
    %c0_2 = arith.constant 0 : index
    %2 = vector.load %arg2[%c0_1, %c0_2] : memref<32x512xbf16, #tpu.memory_space<vmem>>, vector<32x512xbf16>
    %cst = arith.constant dense<0.000000e+00> : vector<16x512xf32>
    %3 = tpu.matmul %1, %2, %cst {dimension_numbers = #tpu.dot_dimension_numbers<[1], [0], [0], [1], [0, 0, 1, 1], [], []>} : vector<16x32xbf16>, vector<32x512xbf16>, vector<16x512xf32> -> vector<16x512xf32>
    %c0_3 = arith.constant 0 : index
    %c0_4 = arith.constant 0 : index
    %4 = vector.load %arg3[%c0_3, %c0_4] : memref<1x512xf32, #tpu.memory_space<vmem>>, vector<1x512xf32>
    %5 = vector.broadcast %4 : vector<1x512xf32> to vector<16x512xf32>
    %6 = arith.addf %3, %5 : vector<16x512xf32>
    %cst_5 = arith.constant 0.000000e+00 : f32
    %7 = vector.broadcast %cst_5 : f32 to vector<16x512xf32>
    %8 = arith.maximumf %6, %7 : vector<16x512xf32>
    %9 = arith.truncf %8 : vector<16x512xf32> to vector<16x512xbf16>
    %c0_6 = arith.constant 0 : index
    %c0_7 = arith.constant 0 : index
    %10 = vector.load %arg4[%c0_6, %c0_7] : memref<512x128xbf16, #tpu.memory_space<vmem>>, vector<512x128xbf16>
    %cst_8 = arith.constant dense<0.000000e+00> : vector<16x128xf32>
    %11 = tpu.matmul %9, %10, %cst_8 {dimension_numbers = #tpu.dot_dimension_numbers<[1], [0], [0], [1], [0, 0, 1, 1], [], []>} : vector<16x512xbf16>, vector<512x128xbf16>, vector<16x128xf32> -> vector<16x128xf32>
    %c0_9 = arith.constant 0 : index
    %c0_10 = arith.constant 0 : index
    %12 = vector.load %arg5[%c0_9, %c0_10] : memref<1x128xf32, #tpu.memory_space<vmem>>, vector<1x128xf32>
    %13 = vector.broadcast %12 : vector<1x128xf32> to vector<16x128xf32>
    %14 = arith.addf %11, %13 : vector<16x128xf32>
    %cst_11 = arith.constant 0.000000e+00 : f32
    %15 = vector.broadcast %cst_11 : f32 to vector<16x128xf32>
    %16 = arith.maximumf %14, %15 : vector<16x128xf32>
    %17 = arith.truncf %16 : vector<16x128xf32> to vector<16x128xbf16>
    %c0_12 = arith.constant 0 : index
    %c0_13 = arith.constant 0 : index
    %18 = vector.load %arg6[%c0_12, %c0_13] : memref<128x128xbf16, #tpu.memory_space<vmem>>, vector<128x128xbf16>
    %cst_14 = arith.constant dense<0.000000e+00> : vector<16x128xf32>
    %19 = tpu.matmul %17, %18, %cst_14 {dimension_numbers = #tpu.dot_dimension_numbers<[1], [0], [0], [1], [0, 0, 1, 1], [], []>} : vector<16x128xbf16>, vector<128x128xbf16>, vector<16x128xf32> -> vector<16x128xf32>
    %c0_15 = arith.constant 0 : index
    %c0_16 = arith.constant 0 : index
    %20 = vector.load %arg7[%c0_15, %c0_16] : memref<1x128xf32, #tpu.memory_space<vmem>>, vector<1x128xf32>
    %21 = vector.broadcast %20 : vector<1x128xf32> to vector<16x128xf32>
    %22 = arith.addf %19, %21 : vector<16x128xf32>
    %cst_17 = arith.constant 0.000000e+00 : f32
    %23 = vector.broadcast %cst_17 : f32 to vector<16x128xf32>
    %24 = arith.maximumf %22, %23 : vector<16x128xf32>
    %25 = arith.truncf %24 : vector<16x128xf32> to vector<16x128xbf16>
    %c0_18 = arith.constant 0 : index
    %c0_19 = arith.constant 0 : index
    %26 = vector.load %arg8[%c0_18, %c0_19] : memref<128x128xbf16, #tpu.memory_space<vmem>>, vector<128x128xbf16>
    %cst_20 = arith.constant dense<0.000000e+00> : vector<16x128xf32>
    %27 = tpu.matmul %25, %26, %cst_20 {dimension_numbers = #tpu.dot_dimension_numbers<[1], [0], [0], [1], [0, 0, 1, 1], [], []>} : vector<16x128xbf16>, vector<128x128xbf16>, vector<16x128xf32> -> vector<16x128xf32>
    %c0_21 = arith.constant 0 : index
    %c0_22 = arith.constant 0 : index
    %28 = vector.load %arg9[%c0_21, %c0_22] : memref<1x128xf32, #tpu.memory_space<vmem>>, vector<1x128xf32>
    %29 = vector.broadcast %28 : vector<1x128xf32> to vector<16x128xf32>
    %30 = arith.addf %27, %29 : vector<16x128xf32>
    %31 = vector.extract_strided_slice %30 {offsets = [0, 0], sizes = [16, 10], strides = [1, 1]} : vector<16x128xf32> to vector<16x10xf32>
    %c0_23 = arith.constant 0 : index
    %c0_24 = arith.constant 0 : index
    %32 = vector.load %arg10[%c0_23, %c0_24] : memref<16x10xf32, #tpu.memory_space<vmem>>, vector<16x10xf32>
    tpu.vector_store %arg10[%c0_23, %c0_24], %31 {strides = array<i32>} : memref<16x10xf32, #tpu.memory_space<vmem>>, vector<16x10xf32>,
    return
  }
  func.func @transform_0(%arg0: i32) -> (i32, i32) {
    %c0_i32 = arith.constant 0 : i32
    %c0_i32_0 = arith.constant 0 : i32
    return %arg0, %c0_i32 : i32, i32
  }
  func.func @transform_1(%arg0: i32) -> (i32, i32) {
    %c0_i32 = arith.constant 0 : i32
    %c0_i32_0 = arith.constant 0 : i32
    %c0_i32_1 = arith.constant 0 : i32
    return %c0_i32, %c0_i32_0 : i32, i32
  }
  func.func @transform_2(%arg0: i32) -> (i32, i32) {
    %c0_i32 = arith.constant 0 : i32
    %c0_i32_0 = arith.constant 0 : i32
    %c0_i32_1 = arith.constant 0 : i32
    return %c0_i32, %c0_i32_0 : i32, i32
  }
  func.func @transform_3(%arg0: i32) -> (i32, i32) {
    %c0_i32 = arith.constant 0 : i32
    %c0_i32_0 = arith.constant 0 : i32
    %c0_i32_1 = arith.constant 0 : i32
    return %c0_i32, %c0_i32_0 : i32, i32
  }
  func.func @transform_4(%arg0: i32) -> (i32, i32) {
    %c0_i32 = arith.constant 0 : i32
    %c0_i32_0 = arith.constant 0 : i32
    %c0_i32_1 = arith.constant 0 : i32
    return %c0_i32, %c0_i32_0 : i32, i32
  }
  func.func @transform_5(%arg0: i32) -> (i32, i32) {
    %c0_i32 = arith.constant 0 : i32
    %c0_i32_0 = arith.constant 0 : i32
    %c0_i32_1 = arith.constant 0 : i32
    return %c0_i32, %c0_i32_0 : i32, i32
  }
  func.func @transform_6(%arg0: i32) -> (i32, i32) {
    %c0_i32 = arith.constant 0 : i32
    %c0_i32_0 = arith.constant 0 : i32
    %c0_i32_1 = arith.constant 0 : i32
    return %c0_i32, %c0_i32_0 : i32, i32
  }
  func.func @transform_7(%arg0: i32) -> (i32, i32) {
    %c0_i32 = arith.constant 0 : i32
    %c0_i32_0 = arith.constant 0 : i32
    %c0_i32_1 = arith.constant 0 : i32
    return %c0_i32, %c0_i32_0 : i32, i32
  }
  func.func @transform_8(%arg0: i32) -> (i32, i32) {
    %c0_i32 = arith.constant 0 : i32
    %c0_i32_0 = arith.constant 0 : i32
    %c0_i32_1 = arith.constant 0 : i32
    return %c0_i32, %c0_i32_0 : i32, i32
  }
  func.func @transform_9(%arg0: i32) -> (i32, i32) {
    %c0_i32 = arith.constant 0 : i32
    %c0_i32_0 = arith.constant 0 : i32
    return %arg0, %c0_i32 : i32, i32
  }
}

</mosaic_0001>

<llo_original>
// kernel: tpu_custom_call.1
$region0: #{tpu_custom_call.1}
  #allocation0 [shape = 'u32[]', space=smem, size = 0x4, offset = 0x4, fixed_abs, tag = 'smem constant byte address 0x4 - core index']
  #allocation1 [shape = 'u32[144,128]{1,0:T(1,128)}', space=vmem, size = 0x12000, scoped, tag = 'internal scratch']
  %s0 = inlined_call_operand.hbm [shape: f32[16,32], index: 0, kind: input, shape index: {}]
  %s1 = inlined_call_operand.hbm [shape: bf16[32,512], index: 1, kind: input, shape index: {}]
  %s2 = inlined_call_operand.hbm [shape: f32[1,512], index: 2, kind: input, shape index: {}]
  %s3 = inlined_call_operand.hbm [shape: bf16[512,128], index: 3, kind: input, shape index: {}]
  %s4 = inlined_call_operand.vmem [shape: f32[1,128], index: 4, kind: input, shape index: {}]
  %s5 = inlined_call_operand.hbm [shape: bf16[128,128], index: 5, kind: input, shape index: {}]
  %s6 = inlined_call_operand.vmem [shape: f32[1,128], index: 6, kind: input, shape index: {}]
  %s7 = inlined_call_operand.hbm [shape: bf16[128,128], index: 7, kind: input, shape index: {}]
  %s8 = inlined_call_operand.vmem [shape: f32[1,128], index: 8, kind: input, shape index: {}]
  %s9 = inlined_call_operand.hbm [shape: f32[16,10], index: 9, kind: output, shape index: {}]
  %s10 = sld [smem:[#allocation0]]
  $region70: #{tpu_custom_call.1} parent=0
    _
  %s12 = ssub.s32 1, %s10
  %s13 = scalar_select 0, %s12, %s10
  $region1: #{tpu_custom_call.1} parent=0
    #allocation2 [shape = 'u8[8192]{0}', space=vmem, size = 0x2000, scoped, tag = 'input window, operand 0, single buffered']
    #allocation3 [shape = 's32[1]{0}', space=sflag, size = 0x4, scoped, tag = 'scoped memory for tpu_custom_call.1']
    #allocation4 [shape = 's32[1]{0}', space=sflag, size = 0x4, scoped, tag = 'scoped memory for tpu_custom_call.1']
    #allocation5 [shape = 'u8[32768]{0}', space=vmem, size = 0x8000, scoped, tag = 'input window, operand 1, single buffered']
    #allocation6 [shape = 's32[1]{0}', space=sflag, size = 0x4, scoped, tag = 'scoped memory for tpu_custom_call.1']
    #allocation7 [shape = 'u8[2048]{0}', space=vmem, size = 0x800, scoped, tag = 'input window, operand 2, single buffered']
    #allocation8 [shape = 'u8[131072]{0}', space=vmem, size = 0x20000, scoped, tag = 'input window, operand 3, single buffered']
    #allocation9 [shape = 's32[1]{0}', space=sflag, size = 0x4, scoped, tag = 'scoped memory for tpu_custom_call.1']
    #allocation10 [shape = 'u8[32768]{0}', space=vmem, size = 0x8000, scoped, tag = 'input window, operand 5, single buffered']
    #allocation11 [shape = 'u8[32768]{0}', space=vmem, size = 0x8000, scoped, tag = 'input window, operand 7, single buffered']
    #allocation12 [shape = 's32[1]{0}', space=sflag, size = 0x4, scoped, tag = 'scoped memory for tpu_custom_call.1']
    #allocation13 [shape = 'u8[8192]{0}', space=vmem, size = 0x2000, scoped, tag = 'output window, operand 0, single buffered']
    %14 = vsyncpa [#allocation3], 0
    %15 = vsyncpa [#allocation6], 0
    %16 = vsyncpa [#allocation9], 0
    %17 = vsyncpa [#allocation12], 0
    %18 = vsyncpa [#allocation4], 0
    // Predicated region
    $region2: #{tpu_custom_call.1} parent=1 // pred_check
      _
    $region3: #{tpu_custom_call.1} parent=1 // pred_check_branch
      %20 = sbr.rel (0) target = $region5
    $region4: #{tpu_custom_call.1} parent=1 // pred_region
      %s22 = ssub.s32 256, 256
      %23 = vsyncadd [#allocation3], %s22
      %s24 = sshll.u32 [#allocation2], 4
      %s25 = int_to_ptr.vmem [resolvable:$true] %s24
      %30 = dma.hbm_to_vmem [thread:$0]  %s0, 256, %s25, [#allocation3], 128, 128, 8
    $region5: #{tpu_custom_call.1} parent=1 // pred_fallthru
      _
    // Predicated region
    $region6: #{tpu_custom_call.1} parent=1 // pred_check
      _
    $region7: #{tpu_custom_call.1} parent=1 // pred_check_branch
      %32 = sbr.rel (0) target = $region9
    $region8: #{tpu_custom_call.1} parent=1 // pred_region
      %s34 = ssub.s32 1024, 1024
      %35 = vsyncadd [#allocation6], %s34
      %s36 = sshll.u32 [#allocation5], 4
      %s37 = int_to_ptr.vmem [resolvable:$true] %s36
      %42 = dma.hbm_to_vmem [thread:$0]  %s1, 1024, %s37, [#allocation6], 256, 256, 16
    $region9: #{tpu_custom_call.1} parent=1 // pred_fallthru
      _
    // Predicated region
    $region10: #{tpu_custom_call.1} parent=1 // pred_check
      _
    $region11: #{tpu_custom_call.1} parent=1 // pred_check_branch
      %44 = sbr.rel (0) target = $region13
    $region12: #{tpu_custom_call.1} parent=1 // pred_region
      %s46 = ssub.s32 64, 64
      %47 = vsyncadd [#allocation6], %s46
      %s49 = sshll.u32 [#allocation7], 4
      %s50 = int_to_ptr.vmem [resolvable:$true] %s49
      %52 = dma.hbm_to_vmem [thread:$0]  %s2, 64, %s50, [#allocation6]
    $region13: #{tpu_custom_call.1} parent=1 // pred_fallthru
      _
    // Predicated region
    $region14: #{tpu_custom_call.1} parent=1 // pred_check
      _
    $region15: #{tpu_custom_call.1} parent=1 // pred_check_branch
      %54 = sbr.rel (0) target = $region17
    $region16: #{tpu_custom_call.1} parent=1 // pred_region
      %s56 = ssub.s32 4096, 4096
      %57 = vsyncadd [#allocation9], %s56
      %s58 = sshll.u32 [#allocation8], 4
      %s59 = int_to_ptr.vmem [resolvable:$true] %s58
      %64 = dma.hbm_to_vmem [thread:$0]  %s3, 4096, %s59, [#allocation9], 64, 64, 4
    $region17: #{tpu_custom_call.1} parent=1 // pred_fallthru
      _
    // Predicated region
    $region18: #{tpu_custom_call.1} parent=1 // pred_check
      _
    $region19: #{tpu_custom_call.1} parent=1 // pred_check_branch
      %66 = sbr.rel (0) target = $region21
    $region20: #{tpu_custom_call.1} parent=1 // pred_region
      _
    $region21: #{tpu_custom_call.1} parent=1 // pred_fallthru
      _
    // Predicated region
    $region22: #{tpu_custom_call.1} parent=1 // pred_check
      _
    $region23: #{tpu_custom_call.1} parent=1 // pred_check_branch
      %68 = sbr.rel (0) target = $region25
    $region24: #{tpu_custom_call.1} parent=1 // pred_region
      %s70 = ssub.s32 1024, 1024
      %71 = vsyncadd [#allocation9], %s70
      %s72 = sshll.u32 [#allocation10], 4
      %s73 = int_to_ptr.vmem [resolvable:$true] %s72
      %78 = dma.hbm_to_vmem [thread:$0]  %s5, 1024, %s73, [#allocation9], 64, 64, 4
    $region25: #{tpu_custom_call.1} parent=1 // pred_fallthru
      _
    // Predicated region
    $region26: #{tpu_custom_call.1} parent=1 // pred_check
      _
    $region27: #{tpu_custom_call.1} parent=1 // pred_check_branch
      %80 = sbr.rel (0) target = $region29
    $region28: #{tpu_custom_call.1} parent=1 // pred_region
      _
    $region29: #{tpu_custom_call.1} parent=1 // pred_fallthru
      _
    // Predicated region
    $region30: #{tpu_custom_call.1} parent=1 // pred_check
      _
    $region31: #{tpu_custom_call.1} parent=1 // pred_check_branch
      %82 = sbr.rel (0) target = $region33
    $region32: #{tpu_custom_call.1} parent=1 // pred_region
      %s84 = ssub.s32 1024, 1024
      %85 = vsyncadd [#allocation12], %s84
      %s86 = sshll.u32 [#allocation11], 4
      %s87 = int_to_ptr.vmem [resolvable:$true] %s86
      %92 = dma.hbm_to_vmem [thread:$0]  %s7, 1024, %s87, [#allocation12], 64, 64, 4
    $region33: #{tpu_custom_call.1} parent=1 // pred_fallthru
      _
    // Predicated region
    $region34: #{tpu_custom_call.1} parent=1 // pred_check
      _
    $region35: #{tpu_custom_call.1} parent=1 // pred_check_branch
      %94 = sbr.rel (0) target = $region37
    $region36: #{tpu_custom_call.1} parent=1 // pred_region
      _
    $region37: #{tpu_custom_call.1} parent=1 // pred_fallthru
      _
    // Predicated region
    $region38: #{tpu_custom_call.1} parent=1 // pred_check
      _
    $region39: #{tpu_custom_call.1} parent=1 // pred_check_branch
      %96 = sbr.rel (0) target = $region41
    $region40: #{tpu_custom_call.1} parent=1 // pred_region
      %97 = dma.done [#allocation3], 256
    $region41: #{tpu_custom_call.1} parent=1 // pred_fallthru
      _
    // Predicated region
    $region42: #{tpu_custom_call.1} parent=1 // pred_check
      _
    $region43: #{tpu_custom_call.1} parent=1 // pred_check_branch
      %99 = sbr.rel (0) target = $region45
    $region44: #{tpu_custom_call.1} parent=1 // pred_region
      %100 = dma.done [#allocation6], 1024
    $region45: #{tpu_custom_call.1} parent=1 // pred_fallthru
      _
    // Predicated region
    $region46: #{tpu_custom_call.1} parent=1 // pred_check
      _
    $region47: #{tpu_custom_call.1} parent=1 // pred_check_branch
      %102 = sbr.rel (0) target = $region49
    $region48: #{tpu_custom_call.1} parent=1 // pred_region
      %103 = dma.done [#allocation6], 64
    $region49: #{tpu_custom_call.1} parent=1 // pred_fallthru
      _
    // Predicated region
    $region50: #{tpu_custom_call.1} parent=1 // pred_check
      _
    $region51: #{tpu_custom_call.1} parent=1 // pred_check_branch
      %105 = sbr.rel (0) target = $region53
    $region52: #{tpu_custom_call.1} parent=1 // pred_region
      %106 = dma.done [#allocation9], 4096
    $region53: #{tpu_custom_call.1} parent=1 // pred_fallthru
      _
    // Predicated region
    $region54: #{tpu_custom_call.1} parent=1 // pred_check
      _
    $region55: #{tpu_custom_call.1} parent=1 // pred_check_branch
      %108 = sbr.rel (0) target = $region57
    $region56: #{tpu_custom_call.1} parent=1 // pred_region
      %109 = dma.done [#allocation9], 1024
    $region57: #{tpu_custom_call.1} parent=1 // pred_fallthru
      _
    // Predicated region
    $region58: #{tpu_custom_call.1} parent=1 // pred_check
      _
    $region59: #{tpu_custom_call.1} parent=1 // pred_check_branch
      %111 = sbr.rel (0) target = $region61
    $region60: #{tpu_custom_call.1} parent=1 // pred_region
      %112 = dma.done [#allocation12], 1024
    $region61: #{tpu_custom_call.1} parent=1 // pred_fallthru
      _
    %v114 = vld [vmem:[#allocation2] sm:$0xff]
    %v115 = vld [vmem:[#allocation2 + $0x8] sm:$0xff]
    %v116 = vpack.c.bf16 %v115, %v114
    %v117 = vld [vmem:[#allocation5] sm:$0xff]
    %v118 = vld [vmem:[#allocation5 + $0x8] sm:$0xff]
    %v119 = vld [vmem:[#allocation5 + $0x10] sm:$0xff]
    %v120 = vld [vmem:[#allocation5 + $0x18] sm:$0xff]
    %v121 = vld [vmem:[#allocation5 + $0x20] sm:$0xff]
    %v122 = vld [vmem:[#allocation5 + $0x28] sm:$0xff]
    %v123 = vld [vmem:[#allocation5 + $0x30] sm:$0xff]
    %v124 = vld [vmem:[#allocation5 + $0x38] sm:$0xff]
    %v125 = vld [vmem:[#allocation7] sm:$0xf]
    %v127 = vlaneseq
    %v128 = vshrl.u32 %v127, 7
    %v129 = vsub.s32 0, %v128
    %v130 = vrot.slane %v125, %v129
    %v131 = vlaneseq
    %v132 = vshrl.u32 %v131, 7
    %v133 = vsub.s32 1, %v132
    %v134 = vrot.slane %v125, %v133
    %v135 = vlaneseq
    %v136 = vshrl.u32 %v135, 7
    %v137 = vsub.s32 2, %v136
    %v138 = vrot.slane %v125, %v137
    %v139 = vlaneseq
    %v140 = vshrl.u32 %v139, 7
    %v141 = vsub.s32 3, %v140
    %v142 = vrot.slane %v125, %v141
    %v155 = vunpack.c.l.b16 %v117
    %v156 = vunpack.c.h.b16 %v117
    %v157 = vunpack.c.l.b16 %v118
    %v158 = vunpack.c.h.b16 %v118
    %v159 = vunpack.c.l.b16 %v119
    %v160 = vunpack.c.h.b16 %v119
    %v161 = vunpack.c.l.b16 %v120
    %v162 = vunpack.c.h.b16 %v120
    %v163 = vunpack.c.l.b16 %v121
    %v164 = vunpack.c.h.b16 %v121
    %v165 = vunpack.c.l.b16 %v122
    %v166 = vunpack.c.h.b16 %v122
    %v167 = vunpack.c.l.b16 %v123
    %v168 = vunpack.c.h.b16 %v123
    %v169 = vunpack.c.l.b16 %v124
    %v170 = vunpack.c.h.b16 %v124
    %v171 = vpack.c.b16 %v159, %v155
    %v172 = vpack.c.b16 %v160, %v156
    %v173 = vpack.c.b16 %v161, %v157
    %v174 = vpack.c.b16 %v162, %v158
    %v175 = vpack.c.b16 %v167, %v163
    %v176 = vpack.c.b16 %v168, %v164
    %v177 = vpack.c.b16 %v169, %v165
    %v178 = vpack.c.b16 %v170, %v166
    %vm187 = vcmask 261120
    %v189 = vsel %vm187, %v116, 0
    %191 = vmatprep.subr.bf16.mxu0 0
    %192 = vmatpush1.bf16.msra.mxu0 0
    %193 = vmatprep.subr.bf16.mxu0 0
    %194 = vmatpush1.bf16.msra.mxu0 0
    %195 = vmatprep.subr.bf16.mxu0 0
    %196 = vmatpush1.bf16.msra.mxu0 0
    %197 = vmatprep.subr.bf16.mxu0 0
    %198 = vmatpush1.bf16.msra.mxu0 0
    %199 = vmatprep.subr.bf16.mxu0 0
    %200 = vmatpush1.bf16.msra.mxu0 0
    %201 = vmatprep.subr.bf16.mxu0 0
    %202 = vmatpush1.bf16.msra.mxu0 0
    %203 = vmatprep.subr.bf16.mxu0 %v176
    %204 = vmatpush1.bf16.msra.mxu0 %v175
    %205 = vmatprep.subr.bf16.mxu0 %v172
    %206 = vmatpush1.bf16.msra.mxu0 %v171
    %207 = vmatprep.subr.bf16.mxu0 0
    %208 = vmatpush2.bf16.msra.mxu0 0
    %209 = vmatprep.subr.bf16.mxu0 0
    %210 = vmatpush2.bf16.msra.mxu0 0
    %211 = vmatprep.subr.bf16.mxu0 0
    %212 = vmatpush2.bf16.msra.mxu0 0
    %213 = vmatprep.subr.bf16.mxu0 0
    %214 = vmatpush2.bf16.msra.mxu0 0
    %215 = vmatprep.subr.bf16.mxu0 0
    %216 = vmatpush2.bf16.msra.mxu0 0
    %217 = vmatprep.subr.bf16.mxu0 0
    %218 = vmatpush2.bf16.msra.mxu0 0
    %219 = vmatprep.subr.bf16.mxu0 0
    %220 = vmatpush2.bf16.msra.mxu0 0
    %221 = vmatprep.subr.bf16.mxu0 0
    %222 = vmatpush2.bf16.msra.mxu0 0
    %223 = vmatprep.mubr.bf16.mxu0 0
    %224 = vmatmul.mubr.bf16.gmra.mxu0 %v189
    %v225 = vpop.f32.mrf.mxu0
    %v226 = vadd.f32 %v130, %v225
    %v227 = vpop.f32.mrf.mxu0
    %v228 = vadd.f32 %v134, %v227
    %v229 = vpop.f32.mrf.mxu0
    %v230 = vadd.f32 %v130, %v229
    %v231 = vpop.f32.mrf.mxu0
    %v232 = vadd.f32 %v134, %v231
    %233 = vdwg.mxu0
    %234 = vmatprep.subr.bf16.mxu0 0
    %235 = vmatpush1.bf16.msra.mxu0 0
    %236 = vmatprep.subr.bf16.mxu0 0
    %237 = vmatpush1.bf16.msra.mxu0 0
    %238 = vmatprep.subr.bf16.mxu0 0
    %239 = vmatpush1.bf16.msra.mxu0 0
    %240 = vmatprep.subr.bf16.mxu0 0
    %241 = vmatpush1.bf16.msra.mxu0 0
    %242 = vmatprep.subr.bf16.mxu0 0
    %243 = vmatpush1.bf16.msra.mxu0 0
    %244 = vmatprep.subr.bf16.mxu0 0
    %245 = vmatpush1.bf16.msra.mxu0 0
    %246 = vmatprep.subr.bf16.mxu0 %v178
    %247 = vmatpush1.bf16.msra.mxu0 %v177
    %248 = vmatprep.subr.bf16.mxu0 %v174
    %249 = vmatpush1.bf16.msra.mxu0 %v173
    %250 = vmatprep.subr.bf16.mxu0 0
    %251 = vmatpush2.bf16.msra.mxu0 0
    %252 = vmatprep.subr.bf16.mxu0 0
    %253 = vmatpush2.bf16.msra.mxu0 0
    %254 = vmatprep.subr.bf16.mxu0 0
    %255 = vmatpush2.bf16.msra.mxu0 0
    %256 = vmatprep.subr.bf16.mxu0 0
    %257 = vmatpush2.bf16.msra.mxu0 0
    %258 = vmatprep.subr.bf16.mxu0 0
    %259 = vmatpush2.bf16.msra.mxu0 0
    %260 = vmatprep.subr.bf16.mxu0 0
    %261 = vmatpush2.bf16.msra.mxu0 0
    %262 = vmatprep.subr.bf16.mxu0 0
    %263 = vmatpush2.bf16.msra.mxu0 0
    %264 = vmatprep.subr.bf16.mxu0 0
    %265 = vmatpush2.bf16.msra.mxu0 0
    %266 = vmatprep.mubr.bf16.mxu0 0
    %267 = vmatmul.mubr.bf16.gmra.mxu0 %v189
    %v268 = vpop.f32.mrf.mxu0
    %v269 = vadd.f32 %v138, %v268
    %v270 = vpop.f32.mrf.mxu0
    %v271 = vadd.f32 %v142, %v270
    %v272 = vpop.f32.mrf.mxu0
    %v273 = vadd.f32 %v138, %v272
    %v274 = vpop.f32.mrf.mxu0
    %v275 = vadd.f32 %v142, %v274
    %276 = vdwg.mxu0
    %v277 = vmax.f32 %v226, 0.0
    %v278 = vmax.f32 %v228, 0.0
    %v279 = vmax.f32 %v269, 0.0
    %v280 = vmax.f32 %v271, 0.0
    %v281 = vmax.f32 %v230, 0.0
    %v282 = vmax.f32 %v232, 0.0
    %v283 = vmax.f32 %v273, 0.0
    %v284 = vmax.f32 %v275, 0.0
    %v285 = vpack.c.bf16 %v281, %v277
    %v286 = vpack.c.bf16 %v282, %v278
    %v287 = vpack.c.bf16 %v283, %v279
    %v288 = vpack.c.bf16 %v284, %v280
    %v289 = vld [vmem:[#allocation8] sm:$0xf]
    %v290 = vld [vmem:[#allocation8 + $0x4] sm:$0xf]
    %v291 = vld [vmem:[#allocation8 + $0x8] sm:$0xf]
    %v292 = vld [vmem:[#allocation8 + $0xc] sm:$0xf]
    %v293 = vld [vmem:[#allocation8 + $0x10] sm:$0xf]
    %v294 = vld [vmem:[#allocation8 + $0x14] sm:$0xf]
    %v295 = vld [vmem:[#allocation8 + $0x18] sm:$0xf]
    %v296 = vld [vmem:[#allocation8 + $0x1c] sm:$0xf]
    %v297 = vld [vmem:[#allocation8 + $0x20] sm:$0xf]
    %v298 = vld [vmem:[#allocation8 + $0x24] sm:$0xf]
    %v299 = vld [vmem:[#allocation8 + $0x28] sm:$0xf]
    %v300 = vld [vmem:[#allocation8 + $0x2c] sm:$0xf]
    %v301 = vld [vmem:[#allocation8 + $0x30] sm:$0xf]
    %v302 = vld [vmem:[#allocation8 + $0x34] sm:$0xf]
    %v303 = vld [vmem:[#allocation8 + $0x38] sm:$0xf]
    %v304 = vld [vmem:[#allocation8 + $0x3c] sm:$0xf]
    %v305 = vld [vmem:[#allocation8 + $0x40] sm:$0xf]
    %v306 = vld [vmem:[#allocation8 + $0x44] sm:$0xf]
    %v307 = vld [vmem:[#allocation8 + $0x48] sm:$0xf]
    %v308 = vld [vmem:[#allocation8 + $0x4c] sm:$0xf]
    %v309 = vld [vmem:[#allocation8 + $0x50] sm:$0xf]
    %v310 = vld [vmem:[#allocation8 + $0x54] sm:$0xf]
    %v311 = vld [vmem:[#allocation8 + $0x58] sm:$0xf]
    %v312 = vld [vmem:[#allocation8 + $0x5c] sm:$0xf]
    %v313 = vld [vmem:[#allocation8 + $0x60] sm:$0xf]
    %v314 = vld [vmem:[#allocation8 + $0x64] sm:$0xf]
    %v315 = vld [vmem:[#allocation8 + $0x68] sm:$0xf]
    %v316 = vld [vmem:[#allocation8 + $0x6c] sm:$0xf]
    %v317 = vld [vmem:[#allocation8 + $0x70] sm:$0xf]
    %v318 = vld [vmem:[#allocation8 + $0x74] sm:$0xf]
    %v319 = vld [vmem:[#allocation8 + $0x78] sm:$0xf]
    %v320 = vld [vmem:[#allocation8 + $0x7c] sm:$0xf]
    %v321 = vld [vmem:[#allocation8 + $0x80] sm:$0xf]
    %v322 = vld [vmem:[#allocation8 + $0x84] sm:$0xf]
    %v323 = vld [vmem:[#allocation8 + $0x88] sm:$0xf]
    %v324 = vld [vmem:[#allocation8 + $0x8c] sm:$0xf]
    %v325 = vld [vmem:[#allocation8 + $0x90] sm:$0xf]
    %v326 = vld [vmem:[#allocation8 + $0x94] sm:$0xf]
    %v327 = vld [vmem:[#allocation8 + $0x98] sm:$0xf]
    %v328 = vld [vmem:[#allocation8 + $0x9c] sm:$0xf]
    %v329 = vld [vmem:[#allocation8 + $0xa0] sm:$0xf]
    %v330 = vld [vmem:[#allocation8 + $0xa4] sm:$0xf]
    %v331 = vld [vmem:[#allocation8 + $0xa8] sm:$0xf]
    %v332 = vld [vmem:[#allocation8 + $0xac] sm:$0xf]
    %v333 = vld [vmem:[#allocation8 + $0xb0] sm:$0xf]
    %v334 = vld [vmem:[#allocation8 + $0xb4] sm:$0xf]
    %v335 = vld [vmem:[#allocation8 + $0xb8] sm:$0xf]
    %v336 = vld [vmem:[#allocation8 + $0xbc] sm:$0xf]
    %v337 = vld [vmem:[#allocation8 + $0xc0] sm:$0xf]
    %v338 = vld [vmem:[#allocation8 + $0xc4] sm:$0xf]
    %v339 = vld [vmem:[#allocation8 + $0xc8] sm:$0xf]
    %v340 = vld [vmem:[#allocation8 + $0xcc] sm:$0xf]
    %v341 = vld [vmem:[#allocation8 + $0xd0] sm:$0xf]
    %v342 = vld [vmem:[#allocation8 + $0xd4] sm:$0xf]
    %v343 = vld [vmem:[#allocation8 + $0xd8] sm:$0xf]
    %v344 = vld [vmem:[#allocation8 + $0xdc] sm:$0xf]
    %v345 = vld [vmem:[#allocation8 + $0xe0] sm:$0xf]
    %v346 = vld [vmem:[#allocation8 + $0xe4] sm:$0xf]
    %v347 = vld [vmem:[#allocation8 + $0xe8] sm:$0xf]
    %v348 = vld [vmem:[#allocation8 + $0xec] sm:$0xf]
    %v349 = vld [vmem:[#allocation8 + $0xf0] sm:$0xf]
    %v350 = vld [vmem:[#allocation8 + $0xf4] sm:$0xf]
    %v351 = vld [vmem:[#allocation8 + $0xf8] sm:$0xf]
    %v352 = vld [vmem:[#allocation8 + $0xfc] sm:$0xf]
    %v353 = vld [vmem:[%s4] sm:$0x1]
    %v355 = vlaneseq
    %v356 = vshrl.u32 %v355, 7
    %v357 = vsub.s32 0, %v356
    %v358 = vrot.slane %v353, %v357
    %v424 = vunpack.c.l.b16 %v289
    %v425 = vunpack.c.l.b16 %v290
    %v426 = vunpack.c.l.b16 %v291
    %v427 = vunpack.c.l.b16 %v292
    %v428 = vunpack.c.l.b16 %v293
    %v429 = vunpack.c.l.b16 %v294
    %v430 = vunpack.c.l.b16 %v295
    %v431 = vunpack.c.l.b16 %v296
    %v432 = vunpack.c.l.b16 %v297
    %v433 = vunpack.c.l.b16 %v298
    %v434 = vunpack.c.l.b16 %v299
    %v435 = vunpack.c.l.b16 %v300
    %v436 = vunpack.c.l.b16 %v301
    %v437 = vunpack.c.l.b16 %v302
    %v438 = vunpack.c.l.b16 %v303
    %v439 = vunpack.c.l.b16 %v304
    %v440 = vunpack.c.l.b16 %v305
    %v441 = vunpack.c.l.b16 %v306
    %v442 = vunpack.c.l.b16 %v307
    %v443 = vunpack.c.l.b16 %v308
    %v444 = vunpack.c.l.b16 %v309
    %v445 = vunpack.c.l.b16 %v310
    %v446 = vunpack.c.l.b16 %v311
    %v447 = vunpack.c.l.b16 %v312
    %v448 = vunpack.c.l.b16 %v313
    %v449 = vunpack.c.l.b16 %v314
    %v450 = vunpack.c.l.b16 %v315
    %v451 = vunpack.c.l.b16 %v316
    %v452 = vunpack.c.l.b16 %v317
    %v453 = vunpack.c.l.b16 %v318
    %v454 = vunpack.c.l.b16 %v319
    %v455 = vunpack.c.l.b16 %v320
    %v456 = vunpack.c.l.b16 %v321
    %v457 = vunpack.c.l.b16 %v322
    %v458 = vunpack.c.l.b16 %v323
    %v459 = vunpack.c.l.b16 %v324
    %v460 = vunpack.c.l.b16 %v325
    %v461 = vunpack.c.l.b16 %v326
    %v462 = vunpack.c.l.b16 %v327
    %v463 = vunpack.c.l.b16 %v328
    %v464 = vunpack.c.l.b16 %v329
    %v465 = vunpack.c.l.b16 %v330
    %v466 = vunpack.c.l.b16 %v331
    %v467 = vunpack.c.l.b16 %v332
    %v468 = vunpack.c.l.b16 %v333
    %v469 = vunpack.c.l.b16 %v334
    %v470 = vunpack.c.l.b16 %v335
    %v471 = vunpack.c.l.b16 %v336
    %v472 = vunpack.c.l.b16 %v337
    %v473 = vunpack.c.l.b16 %v338
    %v474 = vunpack.c.l.b16 %v339
    %v475 = vunpack.c.l.b16 %v340
    %v476 = vunpack.c.l.b16 %v341
    %v477 = vunpack.c.l.b16 %v342
    %v478 = vunpack.c.l.b16 %v343
    %v479 = vunpack.c.l.b16 %v344
    %v480 = vunpack.c.l.b16 %v345
    %v481 = vunpack.c.l.b16 %v346
    %v482 = vunpack.c.l.b16 %v347
    %v483 = vunpack.c.l.b16 %v348
    %v484 = vunpack.c.l.b16 %v349
    %v485 = vunpack.c.l.b16 %v350
    %v486 = vunpack.c.l.b16 %v351
    %v487 = vunpack.c.l.b16 %v352
    %v488 = vpack.c.b16 %v425, %v424
    %v489 = vpack.c.b16 %v427, %v426
    %v490 = vpack.c.b16 %v429, %v428
    %v491 = vpack.c.b16 %v431, %v430
    %v492 = vpack.c.b16 %v433, %v432
    %v493 = vpack.c.b16 %v435, %v434
    %v494 = vpack.c.b16 %v437, %v436
    %v495 = vpack.c.b16 %v439, %v438
    %v496 = vpack.c.b16 %v441, %v440
    %v497 = vpack.c.b16 %v443, %v442
    %v498 = vpack.c.b16 %v445, %v444
    %v499 = vpack.c.b16 %v447, %v446
    %v500 = vpack.c.b16 %v449, %v448
    %v501 = vpack.c.b16 %v451, %v450
    %v502 = vpack.c.b16 %v453, %v452
    %v503 = vpack.c.b16 %v455, %v454
    %v504 = vpack.c.b16 %v457, %v456
    %v505 = vpack.c.b16 %v459, %v458
    %v506 = vpack.c.b16 %v461, %v460
    %v507 = vpack.c.b16 %v463, %v462
    %v508 = vpack.c.b16 %v465, %v464
    %v509 = vpack.c.b16 %v467, %v466
    %v510 = vpack.c.b16 %v469, %v468
    %v511 = vpack.c.b16 %v471, %v470
    %v512 = vpack.c.b16 %v473, %v472
    %v513 = vpack.c.b16 %v475, %v474
    %v514 = vpack.c.b16 %v477, %v476
    %v515 = vpack.c.b16 %v479, %v478
    %v516 = vpack.c.b16 %v481, %v480
    %v517 = vpack.c.b16 %v483, %v482
    %v518 = vpack.c.b16 %v485, %v484
    %v519 = vpack.c.b16 %v487, %v486
    %552 = vmatprep.subr.bf16.mxu0 0
    %553 = vmatpush1.bf16.msra.mxu0 %v495
    %554 = vmatprep.subr.bf16.mxu0 0
    %555 = vmatpush1.bf16.msra.mxu0 %v494
    %556 = vmatprep.subr.bf16.mxu0 0
    %557 = vmatpush1.bf16.msra.mxu0 %v493
    %558 = vmatprep.subr.bf16.mxu0 0
    %559 = vmatpush1.bf16.msra.mxu0 %v492
    %560 = vmatprep.subr.bf16.mxu0 0
    %561 = vmatpush1.bf16.msra.mxu0 %v491
    %562 = vmatprep.subr.bf16.mxu0 0
    %563 = vmatpush1.bf16.msra.mxu0 %v490
    %564 = vmatprep.subr.bf16.mxu0 0
    %565 = vmatpush1.bf16.msra.mxu0 %v489
    %566 = vmatprep.subr.bf16.mxu0 0
    %567 = vmatpush1.bf16.msra.mxu0 %v488
    %568 = vmatprep.subr.bf16.mxu0 0
    %569 = vmatpush2.bf16.msra.mxu0 %v503
    %570 = vmatprep.subr.bf16.mxu0 0
    %571 = vmatpush2.bf16.msra.mxu0 %v502
    %572 = vmatprep.subr.bf16.mxu0 0
    %573 = vmatpush2.bf16.msra.mxu0 %v501
    %574 = vmatprep.subr.bf16.mxu0 0
    %575 = vmatpush2.bf16.msra.mxu0 %v500
    %576 = vmatprep.subr.bf16.mxu0 0
    %577 = vmatpush2.bf16.msra.mxu0 %v499
    %578 = vmatprep.subr.bf16.mxu0 0
    %579 = vmatpush2.bf16.msra.mxu0 %v498
    %580 = vmatprep.subr.bf16.mxu0 0
    %581 = vmatpush2.bf16.msra.mxu0 %v497
    %582 = vmatprep.subr.bf16.mxu0 0
    %583 = vmatpush2.bf16.msra.mxu0 %v496
    %584 = vmatprep.mubr.bf16.mxu0 %v286
    %585 = vmatmul.mubr.bf16.gmra.mxu0 %v285
    %v586 = vpop.f32.mrf.mxu0
    %v587 = vadd.f32 %v358, %v586
    %v588 = vpop.f32.mrf.mxu0
    %v589 = vpop.f32.mrf.mxu0
    %v590 = vadd.f32 %v358, %v589
    %v591 = vpop.f32.mrf.mxu0
    %592 = vdwg.mxu0
    %593 = vmatprep.subr.bf16.mxu0 0
    %594 = vmatpush1.bf16.msra.mxu0 %v511
    %595 = vmatprep.subr.bf16.mxu0 0
    %596 = vmatpush1.bf16.msra.mxu0 %v510
    %597 = vmatprep.subr.bf16.mxu0 0
    %598 = vmatpush1.bf16.msra.mxu0 %v509
    %599 = vmatprep.subr.bf16.mxu0 0
    %600 = vmatpush1.bf16.msra.mxu0 %v508
    %601 = vmatprep.subr.bf16.mxu0 0
    %602 = vmatpush1.bf16.msra.mxu0 %v507
    %603 = vmatprep.subr.bf16.mxu0 0
    %604 = vmatpush1.bf16.msra.mxu0 %v506
    %605 = vmatprep.subr.bf16.mxu0 0
    %606 = vmatpush1.bf16.msra.mxu0 %v505
    %607 = vmatprep.subr.bf16.mxu0 0
    %608 = vmatpush1.bf16.msra.mxu0 %v504
    %609 = vmatprep.subr.bf16.mxu0 0
    %610 = vmatpush2.bf16.msra.mxu0 %v519
    %611 = vmatprep.subr.bf16.mxu0 0
    %612 = vmatpush2.bf16.msra.mxu0 %v518
    %613 = vmatprep.subr.bf16.mxu0 0
    %614 = vmatpush2.bf16.msra.mxu0 %v517
    %615 = vmatprep.subr.bf16.mxu0 0
    %616 = vmatpush2.bf16.msra.mxu0 %v516
    %617 = vmatprep.subr.bf16.mxu0 0
    %618 = vmatpush2.bf16.msra.mxu0 %v515
    %619 = vmatprep.subr.bf16.mxu0 0
    %620 = vmatpush2.bf16.msra.mxu0 %v514
    %621 = vmatprep.subr.bf16.mxu0 0
    %622 = vmatpush2.bf16.msra.mxu0 %v513
    %623 = vmatprep.subr.bf16.mxu0 0
    %624 = vmatpush2.bf16.msra.mxu0 %v512
    %625 = vmatprep.mubr.bf16.mxu0 %v288
    %626 = vmatmul.mubr.bf16.gmra.mxu0 %v287
    %v627 = vpop.f32.mrf.mxu0
    %v628 = vadd.f32 %v587, %v627
    %v629 = vpop.f32.mrf.mxu0
    %v630 = vpop.f32.mrf.mxu0
    %v631 = vadd.f32 %v590, %v630
    %v632 = vpop.f32.mrf.mxu0
    %633 = vdwg.mxu0
    %v634 = vmax.f32 %v628, 0.0
    %v635 = vmax.f32 %v631, 0.0
    %v636 = vpack.c.bf16 %v635, %v634
    %v637 = vld [vmem:[#allocation10] sm:$0xf]
    %v638 = vld [vmem:[#allocation10 + $0x4] sm:$0xf]
    %v639 = vld [vmem:[#allocation10 + $0x8] sm:$0xf]
    %v640 = vld [vmem:[#allocation10 + $0xc] sm:$0xf]
    %v641 = vld [vmem:[#allocation10 + $0x10] sm:$0xf]
    %v642 = vld [vmem:[#allocation10 + $0x14] sm:$0xf]
    %v643 = vld [vmem:[#allocation10 + $0x18] sm:$0xf]
    %v644 = vld [vmem:[#allocation10 + $0x1c] sm:$0xf]
    %v645 = vld [vmem:[#allocation10 + $0x20] sm:$0xf]
    %v646 = vld [vmem:[#allocation10 + $0x24] sm:$0xf]
    %v647 = vld [vmem:[#allocation10 + $0x28] sm:$0xf]
    %v648 = vld [vmem:[#allocation10 + $0x2c] sm:$0xf]
    %v649 = vld [vmem:[#allocation10 + $0x30] sm:$0xf]
    %v650 = vld [vmem:[#allocation10 + $0x34] sm:$0xf]
    %v651 = vld [vmem:[#allocation10 + $0x38] sm:$0xf]
    %v652 = vld [vmem:[#allocation10 + $0x3c] sm:$0xf]
    %v653 = vld [vmem:[%s6] sm:$0x1]
    %v655 = vlaneseq
    %v656 = vshrl.u32 %v655, 7
    %v657 = vsub.s32 0, %v656
    %v658 = vrot.slane %v653, %v657
    %v676 = vunpack.c.l.b16 %v637
    %v677 = vunpack.c.l.b16 %v638
    %v678 = vunpack.c.l.b16 %v639
    %v679 = vunpack.c.l.b16 %v640
    %v680 = vunpack.c.l.b16 %v641
    %v681 = vunpack.c.l.b16 %v642
    %v682 = vunpack.c.l.b16 %v643
    %v683 = vunpack.c.l.b16 %v644
    %v684 = vunpack.c.l.b16 %v645
    %v685 = vunpack.c.l.b16 %v646
    %v686 = vunpack.c.l.b16 %v647
    %v687 = vunpack.c.l.b16 %v648
    %v688 = vunpack.c.l.b16 %v649
    %v689 = vunpack.c.l.b16 %v650
    %v690 = vunpack.c.l.b16 %v651
    %v691 = vunpack.c.l.b16 %v652
    %v692 = vpack.c.b16 %v677, %v676
    %v693 = vpack.c.b16 %v679, %v678
    %v694 = vpack.c.b16 %v681, %v680
    %v695 = vpack.c.b16 %v683, %v682
    %v696 = vpack.c.b16 %v685, %v684
    %v697 = vpack.c.b16 %v687, %v686
    %v698 = vpack.c.b16 %v689, %v688
    %v699 = vpack.c.b16 %v691, %v690
    %708 = vmatprep.subr.bf16.mxu0 0
    %709 = vmatpush1.bf16.msra.mxu0 %v699
    %710 = vmatprep.subr.bf16.mxu0 0
    %711 = vmatpush1.bf16.msra.mxu0 %v698
    %712 = vmatprep.subr.bf16.mxu0 0
    %713 = vmatpush1.bf16.msra.mxu0 %v697
    %714 = vmatprep.subr.bf16.mxu0 0
    %715 = vmatpush1.bf16.msra.mxu0 %v696
    %716 = vmatprep.subr.bf16.mxu0 0
    %717 = vmatpush1.bf16.msra.mxu0 %v695
    %718 = vmatprep.subr.bf16.mxu0 0
    %719 = vmatpush1.bf16.msra.mxu0 %v694
    %720 = vmatprep.subr.bf16.mxu0 0
    %721 = vmatpush1.bf16.msra.mxu0 %v693
    %722 = vmatprep.subr.bf16.mxu0 0
    %723 = vmatpush1.bf16.msra.mxu0 %v692
    %724 = vmatprep.subr.bf16.mxu0 0
    %725 = vmatpush2.bf16.msra.mxu0 0
    %726 = vmatprep.subr.bf16.mxu0 0
    %727 = vmatpush2.bf16.msra.mxu0 0
    %728 = vmatprep.subr.bf16.mxu0 0
    %729 = vmatpush2.bf16.msra.mxu0 0
    %730 = vmatprep.subr.bf16.mxu0 0
    %731 = vmatpush2.bf16.msra.mxu0 0
    %732 = vmatprep.subr.bf16.mxu0 0
    %733 = vmatpush2.bf16.msra.mxu0 0
    %734 = vmatprep.subr.bf16.mxu0 0
    %735 = vmatpush2.bf16.msra.mxu0 0
    %736 = vmatprep.subr.bf16.mxu0 0
    %737 = vmatpush2.bf16.msra.mxu0 0
    %738 = vmatprep.subr.bf16.mxu0 0
    %739 = vmatpush2.bf16.msra.mxu0 0
    %740 = vmatprep.mubr.bf16.mxu0 0
    %741 = vmatmul.mubr.bf16.gmra.mxu0 %v636
    %v742 = vpop.f32.mrf.mxu0
    %v743 = vadd.f32 %v658, %v742
    %v744 = vpop.f32.mrf.mxu0
    %v745 = vpop.f32.mrf.mxu0
    %v746 = vadd.f32 %v658, %v745
    %v747 = vpop.f32.mrf.mxu0
    %748 = vdwg.mxu0
    %v749 = vmax.f32 %v743, 0.0
    %v750 = vmax.f32 %v746, 0.0
    %v751 = vpack.c.bf16 %v750, %v749
    %v752 = vld [vmem:[#allocation11] sm:$0xf]
    %v753 = vld [vmem:[#allocation11 + $0x4] sm:$0xf]
    %v754 = vld [vmem:[#allocation11 + $0x8] sm:$0xf]
    %v755 = vld [vmem:[#allocation11 + $0xc] sm:$0xf]
    %v756 = vld [vmem:[#allocation11 + $0x10] sm:$0xf]
    %v757 = vld [vmem:[#allocation11 + $0x14] sm:$0xf]
    %v758 = vld [vmem:[#allocation11 + $0x18] sm:$0xf]
    %v759 = vld [vmem:[#allocation11 + $0x1c] sm:$0xf]
    %v760 = vld [vmem:[#allocation11 + $0x20] sm:$0xf]
    %v761 = vld [vmem:[#allocation11 + $0x24] sm:$0xf]
    %v762 = vld [vmem:[#allocation11 + $0x28] sm:$0xf]
    %v763 = vld [vmem:[#allocation11 + $0x2c] sm:$0xf]
    %v764 = vld [vmem:[#allocation11 + $0x30] sm:$0xf]
    %v765 = vld [vmem:[#allocation11 + $0x34] sm:$0xf]
    %v766 = vld [vmem:[#allocation11 + $0x38] sm:$0xf]
    %v767 = vld [vmem:[#allocation11 + $0x3c] sm:$0xf]
    %v768 = vld [vmem:[%s8] sm:$0x1]
    %v770 = vlaneseq
    %v771 = vshrl.u32 %v770, 7
    %v772 = vsub.s32 0, %v771
    %v773 = vrot.slane %v768, %v772
    %v791 = vunpack.c.l.b16 %v752
    %v792 = vunpack.c.l.b16 %v753
    %v793 = vunpack.c.l.b16 %v754
    %v794 = vunpack.c.l.b16 %v755
    %v795 = vunpack.c.l.b16 %v756
    %v796 = vunpack.c.l.b16 %v757
    %v797 = vunpack.c.l.b16 %v758
    %v798 = vunpack.c.l.b16 %v759
    %v799 = vunpack.c.l.b16 %v760
    %v800 = vunpack.c.l.b16 %v761
    %v801 = vunpack.c.l.b16 %v762
    %v802 = vunpack.c.l.b16 %v763
    %v803 = vunpack.c.l.b16 %v764
    %v804 = vunpack.c.l.b16 %v765
    %v805 = vunpack.c.l.b16 %v766
    %v806 = vunpack.c.l.b16 %v767
    %v807 = vpack.c.b16 %v792, %v791
    %v808 = vpack.c.b16 %v794, %v793
    %v809 = vpack.c.b16 %v796, %v795
    %v810 = vpack.c.b16 %v798, %v797
    %v811 = vpack.c.b16 %v800, %v799
    %v812 = vpack.c.b16 %v802, %v801
    %v813 = vpack.c.b16 %v804, %v803
    %v814 = vpack.c.b16 %v806, %v805
    %823 = vmatprep.subr.bf16.mxu0 0
    %824 = vmatpush1.bf16.msra.mxu0 %v814
    %825 = vmatprep.subr.bf16.mxu0 0
    %826 = vmatpush1.bf16.msra.mxu0 %v813
    %827 = vmatprep.subr.bf16.mxu0 0
    %828 = vmatpush1.bf16.msra.mxu0 %v812
    %829 = vmatprep.subr.bf16.mxu0 0
    %830 = vmatpush1.bf16.msra.mxu0 %v811
    %831 = vmatprep.subr.bf16.mxu0 0
    %832 = vmatpush1.bf16.msra.mxu0 %v810
    %833 = vmatprep.subr.bf16.mxu0 0
    %834 = vmatpush1.bf16.msra.mxu0 %v809
    %835 = vmatprep.subr.bf16.mxu0 0
    %836 = vmatpush1.bf16.msra.mxu0 %v808
    %837 = vmatprep.subr.bf16.mxu0 0
    %838 = vmatpush1.bf16.msra.mxu0 %v807
    %839 = vmatprep.subr.bf16.mxu0 0
    %840 = vmatpush2.bf16.msra.mxu0 0
    %841 = vmatprep.subr.bf16.mxu0 0
    %842 = vmatpush2.bf16.msra.mxu0 0
    %843 = vmatprep.subr.bf16.mxu0 0
    %844 = vmatpush2.bf16.msra.mxu0 0
    %845 = vmatprep.subr.bf16.mxu0 0
    %846 = vmatpush2.bf16.msra.mxu0 0
    %847 = vmatprep.subr.bf16.mxu0 0
    %848 = vmatpush2.bf16.msra.mxu0 0
    %849 = vmatprep.subr.bf16.mxu0 0
    %850 = vmatpush2.bf16.msra.mxu0 0
    %851 = vmatprep.subr.bf16.mxu0 0
    %852 = vmatpush2.bf16.msra.mxu0 0
    %853 = vmatprep.subr.bf16.mxu0 0
    %854 = vmatpush2.bf16.msra.mxu0 0
    %855 = vmatprep.mubr.bf16.mxu0 0
    %856 = vmatmul.mubr.bf16.gmra.mxu0 %v751
    %v857 = vpop.f32.mrf.mxu0
    %v858 = vadd.f32 %v773, %v857
    %v859 = vpop.f32.mrf.mxu0
    %v860 = vpop.f32.mrf.mxu0
    %v861 = vadd.f32 %v773, %v860
    %v862 = vpop.f32.mrf.mxu0
    %863 = vdwg.mxu0
    %vm864 = vcmask 80896
    %865 = vst.msk [vmem:[#allocation13] sm:$0xff] %vm864, %v858
    %866 = vst.msk [vmem:[#allocation13 + $0x8] sm:$0xff] %vm864, %v861
    // Predicated region
    $region62: #{tpu_custom_call.1} parent=1 // pred_check
      _
    $region63: #{tpu_custom_call.1} parent=1 // pred_check_branch
      %868 = sbr.rel (0) target = $region65
    $region64: #{tpu_custom_call.1} parent=1 // pred_region
      %s870 = ssub.s32 256, 256
      %871 = vsyncadd [#allocation4], %s870
      %s872 = sshll.u32 [#allocation13], 4
      %s873 = int_to_ptr.vmem [resolvable:$true] %s872
      %878 = dma.vmem_to_hbm [thread:$0]  %s873, 256, %s9, [#allocation4], 128, 128, 8
    $region65: #{tpu_custom_call.1} parent=1 // pred_fallthru
      _
    // Predicated region
    $region66: #{tpu_custom_call.1} parent=1 // pred_check
      _
    $region67: #{tpu_custom_call.1} parent=1 // pred_check_branch
      %880 = sbr.rel (0) target = $region69
    $region68: #{tpu_custom_call.1} parent=1 // pred_region
      %881 = dma.done [#allocation4], 256
    $region69: #{tpu_custom_call.1} parent=1 // pred_fallthru
      _
    %882 = vsyncpa [#allocation3], 1
    %883 = vsyncpa [#allocation6], 1
    %884 = vsyncpa [#allocation9], 1
    %885 = vsyncpa [#allocation12], 1
    %886 = vsyncpa [#allocation4], 1

</llo_original>
